<compile_context>
chip_gen: v7x
topology: tpu7x:2x2x1
jax: 0.10.0
libtpu: 0.0.40
codegen_flags: <defaults>
</compile_context>

<pallas_src>
import functools

import jax
import jax.numpy as jnp
from jax.experimental import pallas as pl
from jax.experimental.pallas import tpu as pltpu


# ----------------------------------------------------------------------------- kernels

def _squeeze1_kernel(w_ref, x_ref, o_ref):
    """squeeze1: bias-free 1x1 conv, channels-first.

    w_ref: (u, up_ch)       bf16
    x_ref: (1, up_ch, Tp)   bf16   zero-padded 'up' channels, spatial flattened on lanes
    o_ref: (1, u, Tp)       bf16
    """
    o_ref[0] = jnp.dot(w_ref[...], x_ref[0],
                       preferred_element_type=jnp.float32).astype(o_ref.dtype)


def _cru_main_kernel(taps_ref, xlow_ref, wg_ref, wlow_ref, bias_ref, s_ref, o_ref):
    """Fused GWC+PWC1 / squeeze2+PWC2+identity / softmax re-weight / split-sum.

    taps_ref: (1, K*K*u, T)  bf16   K*K shifted windows of the squeezed 'up' map
    xlow_ref: (1, low_ch, T) bf16   raw 'low' channels
    wg_ref  : (C, K*K*u)     bf16   block-diag grouped-conv taps, PWC1 folded (centre)
    wlow_ref: (C, low_ch)    bf16   (Wsq2^T @ [Wpwc2^T | I])^T
    bias_ref: (C, 1)         f32    GWC bias
    s_ref   : (1, 2, C, 1)   f32    softmax channel weights (s1 row 0, s2 row 1)
    o_ref   : (1, C, T)             final output tile (lane-dense)
    """
    y1 = jnp.dot(wg_ref[...], taps_ref[0],
                 preferred_element_type=jnp.float32) + bias_ref[...]       # (C, T)
    y2 = jnp.dot(wlow_ref[...], xlow_ref[0],
                 preferred_element_type=jnp.float32)                       # (C, T)
    o_ref[0] = (s_ref[0, 0] * y1 + s_ref[0, 1] * y2).astype(o_ref.dtype)


# ----------------------------------------------------------------------------- helpers

def _round_up(n, m):
    return ((n + m - 1) // m) * m


def _pick_lane_tile(n, cap=2048):
    """Largest lane tile (multiple of 128) dividing n; full n if it already fits."""
    if n <= cap:
        return n
    for t in range(cap, 127, -128):
        if n % t == 0:
            return t
    return n


# ----------------------------------------------------------------------------- wrapper

def cru_forward(x, params, *, alpha=0.5, squeeze_radio=2, group_size=2,
                group_kernel_size=3):
    B, C, H, W = x.shape
    up_ch = int(alpha * C)
    low_ch = C - up_ch
    assert up_ch % squeeze_radio == 0 and low_ch % squeeze_radio == 0
    u = up_ch // squeeze_radio
    low_sq = low_ch // squeeze_radio
    assert u % group_size == 0 and C % group_size == 0
    K = group_kernel_size
    pad = K // 2
    HW = H * W
    Hp, Wp = H + 2 * pad, W + 2 * pad
    Npad = Hp * Wp

    # ---- layout: channels-first end to end (channels on sublanes, spatial on lanes).
    # Zero-pad `up` spatially; squeeze1 is bias-free so squeezing the padded tensor
    # gives exactly the zero padding the grouped 3x3 conv needs.
    up_pad = jnp.pad(x[:, :up_ch].astype(jnp.bfloat16),
                     ((0, 0), (0, 0), (pad, pad), (pad, pad)))             # (B,up_ch,Hp,Wp)
    Npad_r = _round_up(Npad, 128)
    up_pad_flat = up_pad.reshape(B, up_ch, Npad)
    if Npad_r != Npad:
        up_pad_flat = jnp.pad(up_pad_flat, ((0, 0), (0, 0), (0, Npad_r - Npad)))
    w_sq1 = params["sq1_w"].astype(jnp.bfloat16)                           # (u, up_ch)

    # ---- kernel 1: squeeze1 (1x1 conv) over all padded pixels
    Tp = _pick_lane_tile(Npad_r)
    up_s_flat = pl.pallas_call(
        _squeeze1_kernel,
        out_shape=jax.ShapeDtypeStruct((B, u, Npad_r), jnp.bfloat16),
        grid=(B, Npad_r // Tp),
        in_specs=[pl.BlockSpec((u, up_ch), lambda b, t: (0, 0)),
                  pl.BlockSpec((1, up_ch, Tp), lambda b, t: (b, 0, t))],
        out_specs=pl.BlockSpec((1, u, Tp), lambda b, t: (b, 0, t)),
        compiler_params=pltpu.CompilerParams(
            dimension_semantics=("parallel", "parallel")),
    )(w_sq1, up_pad_flat)
    up_s_sp = up_s_flat[:, :, :Npad].reshape(B, u, Hp, Wp)                 # bf16

    # ---- glue: gather the K*K shifted windows of the (small, u=C/4 channel) squeezed
    # map.  TODO(synk): for very large H*W this gather should move in-kernel (halo DMA)
    # to avoid the K*K HBM read amplification; on the u-channel map it is only ~K*K*C/4.
    taps = jnp.concatenate(
        [up_s_sp[:, :, kh:kh + H, kw:kw + W] for kh in range(K) for kw in range(K)],
        axis=1).reshape(B, K * K * u, HW)                                  # bf16
    x_low = x[:, up_ch:].reshape(B, low_ch, HW).astype(jnp.bfloat16)

    HWr = _round_up(HW, 128)
    if HWr != HW:
        taps = jnp.pad(taps, ((0, 0), (0, 0), (0, HWr - HW)))
        x_low = jnp.pad(x_low, ((0, 0), (0, 0), (0, HWr - HW)))

    # ---- exact weight folds (done once, tiny, f32)
    inpg = u // group_size
    outpg = C // group_size
    wg_t = jnp.transpose(params["gwc_w"], (2, 3, 1, 0))                    # (K,K,inpg,C)
    w_dense = jnp.zeros((K, K, u, C), jnp.float32)                         # block-diag GWC
    for go in range(group_size):
        w_dense = w_dense.at[:, :, go * inpg:(go + 1) * inpg,
                             go * outpg:(go + 1) * outpg].set(
            wg_t[:, :, :, go * outpg:(go + 1) * outpg])
    w_dense = w_dense.at[pad, pad].add(params["pwc1_w"].T)                 # Y1 = GWC+PWC1
    w_gwc = w_dense.reshape(K * K * u, C)                                  # (K*K*u, C)
    gwc_bias = params["gwc_b"].astype(jnp.float32)                         # (C,)

    # low path: Y2 = cat([PWC2(sq2(low)), sq2(low)]) == (Wsq2^T @ [Wpwc2^T | I])^T @ low
    w_cat = jnp.concatenate([params["pwc2_w"].T,
                             jnp.eye(low_sq, dtype=jnp.float32)], axis=1)  # (low_sq, C)
    w_low = params["sq2_w"].T @ w_cat                                      # (low_ch, C)

    # ---- analytic global average pool (linearity: mean_p(conv(x)) == conv(mean_p(x))),
    # so the softmax weights are available before the heavy kernel runs and no big
    # intermediate is ever written to HBM.
    inv_hw = 1.0 / float(HW)
    tap_sums = jnp.concatenate(
        [jnp.sum(up_s_sp[:, :, kh:kh + H, kw:kw + W].astype(jnp.float32), axis=(2, 3))
         for kh in range(K) for kw in range(K)], axis=1)                   # (B, K*K*u)
    pool1 = (tap_sums * inv_hw) @ w_gwc + gwc_bias[None, :]                # (B, C)
    low_mean = jnp.mean(x[:, up_ch:].astype(jnp.float32), axis=(2, 3))     # (B, low_ch)
    pool2 = low_mean @ w_low                                               # (B, C)
    s = jax.nn.softmax(jnp.concatenate([pool1, pool2], axis=1), axis=-1)
    s = s.reshape(B, 2, C, 1).astype(jnp.float32)

    # ---- kernel 2: fused main path, writes the final channels-first output directly
    T = _pick_lane_tile(HWr)
    n_t = HWr // T
    wg_cf = w_gwc.T.astype(jnp.bfloat16)                                   # (C, K*K*u)
    wlow_cf = w_low.T.astype(jnp.bfloat16)                                 # (C, low_ch)
    bias_col = gwc_bias.reshape(C, 1)

    flops = 2 * B * HWr * (K * K * u * C + low_ch * C)
    bytes_accessed = ((taps.size + x_low.size + wg_cf.size + wlow_cf.size) * 2
                      + (bias_col.size + s.size + B * C * HWr) * 4)

    y_cf = pl.pallas_call(
        _cru_main_kernel,
        out_shape=jax.ShapeDtypeStruct((B, C, HWr), x.dtype),
        grid=(B, n_t),
        in_specs=[
            pl.BlockSpec((1, K * K * u, T), lambda b, t: (b, 0, t)),
            pl.BlockSpec((1, low_ch, T), lambda b, t: (b, 0, t)),
            pl.BlockSpec((C, K * K * u), lambda b, t: (0, 0)),
            pl.BlockSpec((C, low_ch), lambda b, t: (0, 0)),
            pl.BlockSpec((C, 1), lambda b, t: (0, 0)),
            pl.BlockSpec((1, 2, C, 1), lambda b, t: (b, 0, 0, 0)),
        ],
        out_specs=pl.BlockSpec((1, C, T), lambda b, t: (b, 0, t)),
        compiler_params=pltpu.CompilerParams(
            dimension_semantics=("parallel", "parallel")),
        cost_estimate=pl.CostEstimate(flops=flops, transcendentals=0,
                                      bytes_accessed=bytes_accessed),
    )(taps, x_low, wg_cf, wlow_cf, bias_col, s)

    return y_cf[:, :, :HW].reshape(B, C, H, W)


# ----------------------------------------------------------------------------- reference

def cru_reference(x, params, *, alpha=0.5, squeeze_radio=2, group_size=2,
                  group_kernel_size=3):
    """Plain-JAX (f32) mirror of the PyTorch CRU.forward."""
    B, C, H, W = x.shape
    up_ch = int(alpha * C)
    pad = group_kernel_size // 2
    up, low = x[:, :up_ch], x[:, up_ch:]
    up_s = jnp.einsum("bchw,oc->bohw", up, params["sq1_w"])
    low_s = jnp.einsum("bchw,oc->bohw", low, params["sq2_w"])
    gwc = jax.lax.conv_general_dilated(
        up_s, params["gwc_w"], window_strides=(1, 1),
        padding=[(pad, pad), (pad, pad)], feature_group_count=group_size,
        dimension_numbers=("NCHW", "OIHW", "NCHW"))
    gwc = gwc + params["gwc_b"][None, :, None, None]
    y1 = gwc + jnp.einsum("bchw,oc->bohw", up_s, params["pwc1_w"])
    y2 = jnp.concatenate(
        [jnp.einsum("bchw,oc->bohw", low_s, params["pwc2_w"]), low_s], axis=1)
    out = jnp.concatenate([y1, y2], axis=1)
    pooled = jnp.mean(out, axis=(2, 3), keepdims=True)
    out = jax.nn.softmax(pooled, axis=1) * out
    return out[:, :C] + out[:, C:]


# ----------------------------------------------------------------------------- params

def init_params(key, op_channel, *, alpha=0.5, squeeze_radio=2, group_size=2,
                group_kernel_size=3):
    up_ch = int(alpha * op_channel)
    low_ch = op_channel - up_ch
    u = up_ch // squeeze_radio
    low_sq = low_ch // squeeze_radio
    K = group_kernel_size
    ks = jax.random.split(key, 6)

    def conv_init(k, shape, fan_in):
        return jax.random.normal(k, shape, jnp.float32) / jnp.sqrt(float(fan_in))

    return {
        "sq1_w": conv_init(ks[0], (u, up_ch), up_ch),                      # squeeze1 (no bias)
        "sq2_w": conv_init(ks[1], (low_sq, low_ch), low_ch),               # squeeze2 (no bias)
        "gwc_w": conv_init(ks[2], (op_channel, u // group_size, K, K),
                           (u // group_size) * K * K),                     # grouped 3x3
        "gwc_b": 0.1 * jax.random.normal(ks[3], (op_channel,), jnp.float32),
        "pwc1_w": conv_init(ks[4], (op_channel, u), u),                    # PWC1 (no bias)
        "pwc2_w": conv_init(ks[5], (op_channel - low_sq, low_sq), low_sq), # PWC2 (no bias)
    }


# ----------------------------------------------------------------------------- main

if __name__ == "__main__":
    # op_channel must be a multiple of 8 so that up/low halves, squeeze_radio=2 and
    # group_size=2 all divide cleanly (same constraint as the PyTorch module).
    B, C, H, W = 2, 16, 16, 16

    key = jax.random.PRNGKey(0)
    kp, kx = jax.random.split(key)
    params = init_params(kp, C)
    x = jax.random.normal(kx, (B, C, H, W), jnp.float32)

    out = cru_forward(x, params)
    out = jax.block_until_ready(out)

    ref = cru_reference(x, params)
    assert out.shape == ref.shape == (B, C, H, W)
    err = float(jnp.max(jnp.abs(out - ref)))
    assert jnp.allclose(out, ref, rtol=2e-2, atol=2e-2), err
    print("KERNEL_OK")
</pallas_src>

<mosaic_0001>
module attributes {stable_mosaic.version = 11 : i64} {
  func.func @_squeeze1_kernel(%arg0: i32, %arg1: i32, %arg2: memref<4x8xbf16, #tpu.memory_space<vmem>>, %arg3: memref<1x8x384xbf16, #tpu.memory_space<vmem>>, %arg4: memref<1x4x384xbf16, #tpu.memory_space<vmem>>) attributes {dimension_semantics = [#tpu.dimension_semantics<parallel>, #tpu.dimension_semantics<parallel>], iteration_bounds = array<i64: 2, 1>, scalar_prefetch = 0 : i64, scratch_operands = 0 : i64, tpu.core_type = #tpu.core_type<tc>, window_params = [{pipeline_mode = #tpu.pipeline_mode<synchronous>, transform_indices = @transform_0, window_bounds = array<i64: 4, 8>}, {transform_indices = @transform_1, window_bounds = array<i64: 1, 8, 384>}, {transform_indices = @transform_2, window_bounds = array<i64: 1, 4, 384>}]} {
    %c0 = arith.constant 0 : index
    %c0_0 = arith.constant 0 : index
    %0 = vector.load %arg2[%c0, %c0_0] : memref<4x8xbf16, #tpu.memory_space<vmem>>, vector<4x8xbf16>
    %c0_1 = arith.constant 0 : index
    %c0_2 = arith.constant 0 : index
    %c0_3 = arith.constant 0 : index
    %1 = vector.load %arg3[%c0_1, %c0_2, %c0_3] : memref<1x8x384xbf16, #tpu.memory_space<vmem>>, vector<1x8x384xbf16>
    %2 = vector.shape_cast %1 : vector<1x8x384xbf16> to vector<8x384xbf16>
    %cst = arith.constant dense<0.000000e+00> : vector<4x384xf32>
    %3 = tpu.matmul %0, %2, %cst {dimension_numbers = #tpu.dot_dimension_numbers<[1], [0], [0], [1], [0, 0, 1, 1], [], []>} : vector<4x8xbf16>, vector<8x384xbf16>, vector<4x384xf32> -> vector<4x384xf32>
    %4 = arith.truncf %3 : vector<4x384xf32> to vector<4x384xbf16>
    %c0_4 = arith.constant 0 : index
    %c0_5 = arith.constant 0 : index
    %c0_6 = arith.constant 0 : index
    %5 = vector.load %arg4[%c0_4, %c0_5, %c0_6] : memref<1x4x384xbf16, #tpu.memory_space<vmem>>, vector<1x4x384xbf16>
    %6 = vector.shape_cast %5 : vector<1x4x384xbf16> to vector<4x384xbf16>
    %7 = vector.shape_cast %4 : vector<4x384xbf16> to vector<1x4x384xbf16>
    tpu.vector_store %arg4[%c0_4, %c0_5, %c0_6], %7 {strides = array<i32>} : memref<1x4x384xbf16, #tpu.memory_space<vmem>>, vector<1x4x384xbf16>,
    return
  }
  func.func @transform_0(%arg0: i32, %arg1: i32) -> (i32, i32) {
    %c0_i32 = arith.constant 0 : i32
    %c0_i32_0 = arith.constant 0 : i32
    %c0_i32_1 = arith.constant 0 : i32
    return %c0_i32, %c0_i32_0 : i32, i32
  }
  func.func @transform_1(%arg0: i32, %arg1: i32) -> (i32, i32, i32) {
    %c0_i32 = arith.constant 0 : i32
    %c0_i32_0 = arith.constant 0 : i32
    return %arg0, %c0_i32, %arg1 : i32, i32, i32
  }
  func.func @transform_2(%arg0: i32, %arg1: i32) -> (i32, i32, i32) {
    %c0_i32 = arith.constant 0 : i32
    %c0_i32_0 = arith.constant 0 : i32
    return %arg0, %c0_i32, %arg1 : i32, i32, i32
  }
}

</mosaic_0001>

<llo_original>
// kernel: tpu_custom_call.1
$region0: #{tpu_custom_call.1}
  #allocation0 [shape = 'u32[]', space=smem, size = 0x4, offset = 0x4, fixed_abs, tag = 'smem constant byte address 0x4 - core index']
  #allocation1 [shape = 'u32[144,128]{1,0:T(1,128)}', space=vmem, size = 0x12000, scoped, tag = 'internal scratch']
  %s0 = inlined_call_operand.hbm [shape: bf16[4,8], index: 0, kind: input, shape index: {}]
  %s1 = inlined_call_operand.hbm [shape: bf16[2,8,384], index: 1, kind: input, shape index: {}]
  %s2 = inlined_call_operand.hbm [shape: bf16[2,4,384], index: 2, kind: output, shape index: {}]
  %s3 = sld [smem:[#allocation0]]
  $region49: #{tpu_custom_call.1} parent=0
    _
  %s5 = ssub.s32 1, %s3
  %s6 = scalar_select 0, %s5, %s3
  $region1: #{tpu_custom_call.1} parent=0
    #allocation2 [shape = 'u8[1024]{0}', space=vmem, size = 0x400, scoped, tag = 'input window, operand 0, single buffered']
    #allocation3 [shape = 's32[2]{0}', space=sflag, size = 0x8, scoped, tag = 'scoped memory for tpu_custom_call.1']
    #allocation4 [shape = 's32[2]{0}', space=sflag, size = 0x8, scoped, tag = 'scoped memory for tpu_custom_call.1']
    #allocation5 [shape = 'u8[12288]{0}', space=vmem, size = 0x3000, scoped, tag = 'input window, operand 1']
    #allocation6 [shape = 's32[2]{0}', space=sflag, size = 0x8, scoped, tag = 'scoped memory for tpu_custom_call.1']
    #allocation7 [shape = 'u8[6144]{0}', space=vmem, size = 0x1800, scoped, tag = 'output window, operand 0']
    %7 = vsyncpa [#allocation3], 0
    %8 = vsyncpa [#allocation6], 0
    %s9 = scalar_lea.sflag [#allocation6], 1
    %10 = vsyncpa %s9, 0
    %11 = vsyncpa [#allocation4], 0
    %s12 = scalar_lea.sflag [#allocation4], 1
    %13 = vsyncpa %s12, 0
    loop: start=0, step=1, limit=4
    $region2: #{tpu_custom_call.1} parent=1 // loop_pre_header
      _
    $region3: #{tpu_custom_call.1} parent=1 // loop_header
      %s15 = sphi 0, %s19
      %p16 = scmp.ge.s32.totalorder %s15, 4
      %s22 = sphi 0, %s34
      %s23 = sphi 0, %s30
      %s24 = sphi 0, %s22
      %s25 = sphi 0, %s23
      %s26 = sphi 0, %s24
      %s27 = sphi 0, %s25
      %s35 = sphi 0, %s35
      %s37 = sphi 0, %s35
      %s38 = sphi 0, %s37
      %s52 = sphi 0, %s38
      %s60 = sphi 0, %s62
      %s63 = sphi 0, %s60
      %s64 = sphi 0, %s63
      %s80 = sphi 0, %s64
      %s88 = sphi 0, %s90
      %s91 = sphi 0, %s88
      %s92 = sphi 0, %s91
      %s108 = sphi 0, %s92
    $region4: #{tpu_custom_call.1} parent=1 // loop_header_branch
      %18 = sbr.rel (%p16) target = $region8
    $region5: #{tpu_custom_call.1} parent=1 // loop_body
      %s20 = ssub.s32 %s15, 1
      %s21 = ssub.s32 %s15, 2
      %s28 = sadd.s32 1, %s23
      %p29 = scmp.ge.s32.totalorder %s28, 1
      %s30 = scalar_select %p29, 0, %s28
      %s31 = sadd.s32 1, %s22
      %s32 = scalar_select %p29, %s31, %s22
      %p33 = scmp.ge.s32.totalorder %s32, 2
      %s34 = scalar_select %p33, 0, %s32
      %s36 = sadd.s32 %s35, 1
      %p39 = scmp.eq.s32.totalorder %s15, 1
      %p40 = scmp.ne.s32.totalorder %s35, %s37
      %p41 = scmp.eq.s32.totalorder %s15, 0
      %p42 = por %p40, %p41
      %p43 = scmp.ne.s32.totalorder %s35, %s37
      %p44 = scmp.eq.s32.totalorder %s20, 1
      %p45 = por %p43, %p44
      %p46 = scmp.ne.s32.totalorder %s37, %s38
      %p47 = scmp.eq.s32.totalorder %s20, 0
      %p48 = por %p46, %p47
      %p49 = scmp.ne.s32.totalorder %s37, %s38
      %p50 = scmp.eq.s32.totalorder %s21, 1
      %p51 = por %p49, %p50
      %p53 = scmp.ne.s32.totalorder %s38, %s52
      %p54 = scmp.eq.s32.totalorder %s21, 0
      %p55 = por %p53, %p54
      %s56 = ssub.s32 %s22, %s34
      %s57 = ssub.s32 %s23, %s30
      %s58 = sor.u32 %s56, %s57
      %p59 = scmp.eq.s32.totalorder %s58, 0
      %s61 = sadd.s32 %s60, 1
      %s62 = scalar_select %p59, %s60, %s61
      %p65 = pneg %p59
      %p66 = scmp.eq.s32.totalorder %s15, 1
      %p67 = por %p65, %p66
      %p68 = scmp.ne.s32.totalorder %s60, %s63
      %p69 = scmp.eq.s32.totalorder %s15, 0
      %p70 = por %p68, %p69
      %p71 = scmp.ne.s32.totalorder %s60, %s63
      %p72 = scmp.eq.s32.totalorder %s20, 1
      %p73 = por %p71, %p72
      %p74 = scmp.ne.s32.totalorder %s63, %s64
      %p75 = scmp.eq.s32.totalorder %s20, 0
      %p76 = por %p74, %p75
      %p77 = scmp.ne.s32.totalorder %s63, %s64
      %p78 = scmp.eq.s32.totalorder %s21, 1
      %p79 = por %p77, %p78
      %p81 = scmp.ne.s32.totalorder %s64, %s80
      %p82 = scmp.eq.s32.totalorder %s21, 0
      %p83 = por %p81, %p82
      %s84 = ssub.s32 %s22, %s34
      %s85 = ssub.s32 %s23, %s30
      %s86 = sor.u32 %s84, %s85
      %p87 = scmp.eq.s32.totalorder %s86, 0
      %s89 = sadd.s32 %s88, 1
      %s90 = scalar_select %p87, %s88, %s89
      %p93 = pneg %p87
      %p94 = scmp.eq.s32.totalorder %s15, 1
      %p95 = por %p93, %p94
      %p96 = scmp.ne.s32.totalorder %s88, %s91
      %p97 = scmp.eq.s32.totalorder %s15, 0
      %p98 = por %p96, %p97
      %p99 = scmp.ne.s32.totalorder %s88, %s91
      %p100 = scmp.eq.s32.totalorder %s20, 1
      %p101 = por %p99, %p100
      %p102 = scmp.ne.s32.totalorder %s91, %s92
      %p103 = scmp.eq.s32.totalorder %s20, 0
      %p104 = por %p102, %p103
      %p105 = scmp.ne.s32.totalorder %s91, %s92
      %p106 = scmp.eq.s32.totalorder %s21, 1
      %p107 = por %p105, %p106
      %p109 = scmp.ne.s32.totalorder %s92, %s108
      %p110 = scmp.eq.s32.totalorder %s21, 0
      %p111 = por %p109, %p110
      %p112 = scmp.le.s32.totalorder 1, %s15
      %p113 = scmp.lt.s32.totalorder %s15, 3
      %p114 = pnand %p112, %p113
      %p115 = pneg %p114
      // Predicated region
      $region9: #{tpu_custom_call.1} parent=5 // pred_check
        _
      $region10: #{tpu_custom_call.1} parent=5 // pred_check_branch
        %117 = sbr.rel (%p114) target = $region12
      $region11: #{tpu_custom_call.1} parent=5 // pred_region
        %s118 = ssub.s32 %s15, 1
        // Predicated region
        $region13: #{tpu_custom_call.1} parent=11 // pred_check
          %p119 = pneg %p48
        $region14: #{tpu_custom_call.1} parent=11 // pred_check_branch
          %121 = sbr.rel (%p119) target = $region16
        $region15: #{tpu_custom_call.1} parent=11 // pred_region
          %s123 = ssub.s32 32, 32
          %124 = vsyncadd [#allocation3], %s123
          %s126 = sshll.u32 [#allocation2], 4
          %s127 = int_to_ptr.vmem [resolvable:$true] %s126
          %129 = dma.hbm_to_vmem [thread:$0]  %s0, 32, %s127, [#allocation3]
        $region16: #{tpu_custom_call.1} parent=11 // pred_fallthru
          _
      $region12: #{tpu_custom_call.1} parent=5 // pred_fallthru
        _
      %p130 = scmp.lt.s32.totalorder %s15, 2
      // Predicated region
      $region17: #{tpu_custom_call.1} parent=5 // pred_check
        %p131 = pneg %p130
      $region18: #{tpu_custom_call.1} parent=5 // pred_check_branch
        %133 = sbr.rel (%p131) target = $region20
      $region19: #{tpu_custom_call.1} parent=5 // pred_region
        // Predicated region
        $region21: #{tpu_custom_call.1} parent=19 // pred_check
          %p134 = pneg %p70
        $region22: #{tpu_custom_call.1} parent=19 // pred_check_branch
          %136 = sbr.rel (%p134) target = $region24
        $region23: #{tpu_custom_call.1} parent=19 // pred_region
          %s137 = sand.u32 %s60, 1
          %s138 = scalar_lea.sflag [#allocation6], %s137
          %s139 = sand.u32 %s60, 1
          %s140 = smul.addr %s139, 12
          %s141 = scalar_lea.vmem [#allocation5], %s140
          %s142 = smul.u32 3, %s23
          %s144 = ssub.s32 192, 192
          %145 = vsyncadd %s138, %s144
          %s146 = smul.addr %s22, 3
          %s147 = sadd.s32 %s142, %s146
          %s148 = smul.addr %s147, 64
          %s149 = scalar_lea.hbm %s1, %s148
          %s151 = sshll.u32 %s141, 4
          %s152 = int_to_ptr.vmem [resolvable:$true] %s151
          %154 = dma.hbm_to_vmem [thread:$0]  %s149, 192, %s152, %s138
        $region24: #{tpu_custom_call.1} parent=19 // pred_fallthru
          _
      $region20: #{tpu_custom_call.1} parent=5 // pred_fallthru
        _
      %p155 = scmp.le.s32.totalorder 1, %s15
      %p156 = scmp.lt.s32.totalorder %s15, 3
      %p157 = pnand %p155, %p156
      %p158 = pneg %p157
      // Predicated region
      $region25: #{tpu_custom_call.1} parent=5 // pred_check
        _
      $region26: #{tpu_custom_call.1} parent=5 // pred_check_branch
        %160 = sbr.rel (%p157) target = $region28
      $region27: #{tpu_custom_call.1} parent=5 // pred_region
        %s161 = ssub.s32 %s15, 1
        // Predicated region
        $region29: #{tpu_custom_call.1} parent=27 // pred_check
          %p162 = pneg %p48
        $region30: #{tpu_custom_call.1} parent=27 // pred_check_branch
          %164 = sbr.rel (%p162) target = $region32
        $region31: #{tpu_custom_call.1} parent=27 // pred_region
          %165 = dma.done [#allocation3], 32
        $region32: #{tpu_custom_call.1} parent=27 // pred_fallthru
          _
        %s166 = sand.u32 %s63, 1
        %s167 = scalar_lea.sflag [#allocation6], %s166
        %s168 = sand.u32 %s63, 1
        %s169 = smul.addr %s168, 12
        %s170 = scalar_lea.vmem [#allocation5], %s169
        // Predicated region
        $region33: #{tpu_custom_call.1} parent=27 // pred_check
          %p171 = pneg %p76
        $region34: #{tpu_custom_call.1} parent=27 // pred_check_branch
          %173 = sbr.rel (%p171) target = $region36
        $region35: #{tpu_custom_call.1} parent=27 // pred_region
          %174 = dma.done %s167, 192
        $region36: #{tpu_custom_call.1} parent=27 // pred_fallthru
          _
        %p175 = pneg %p48
        %p176 = pneg %p45
        %s177 = sand.u32 %s63, 1
        %s178 = scalar_lea.sflag [#allocation6], %s177
        %s179 = sand.u32 %s63, 1
        %s180 = smul.addr %s179, 12
        %s181 = scalar_lea.vmem [#allocation5], %s180
        %p182 = pneg %p76
        %p183 = pneg %p73
        %p184 = pneg %p104
        %p185 = pneg %p101
        %s186 = sand.u32 %s91, 1
        %s187 = scalar_lea.sflag [#allocation4], %s186
        %s188 = sand.u32 %s91, 1
        %s189 = smul.addr %s188, 6
        %s190 = scalar_lea.vmem [#allocation7], %s189
        %s191 = smul.u32 3, %s25
        %s192 = smul.u32 3, %s25
        %v194 = vld [vmem:[#allocation2] sm:$0x3]
        %v195 = vld [vmem:[%s170] sm:$0xff]
        %v196 = vld [vmem:[%s170 + $0x8] sm:$0xf]
        %v199 = vunpack.c.l.b16 %v195
        %v200 = vunpack.c.h.b16 %v195
        %v201 = vunpack.c.l.b16 %v196
        %v202 = vpack.c.b16 %v199, %v199
        %v203 = vpack.c.b16 %v200, %v200
        %v204 = vpack.c.b16 %v201, %v201
        %vm205 = vcmask 64512
        %v207 = vsel %vm205, %v194, 0
        %vm209 = vcmask 1043456
        %v211 = vsel %vm209, %v202, 0
        %v214 = vsel %vm209, %v203, 0
        %v217 = vsel %vm209, %v204, 0
        %219 = vmatprep.subr.bf16.mxu0 %v214
        %220 = vmatpush1.bf16.msra.mxu0 %v211
        %221 = vmatprep.subr.bf16.mxu0 0
        %222 = vmatpush1.bf16.msra.mxu0 0
        %223 = vmatprep.subr.bf16.mxu0 0
        %224 = vmatpush1.bf16.msra.mxu0 0
        %225 = vmatprep.subr.bf16.mxu0 0
        %226 = vmatpush1.bf16.msra.mxu0 0
        %227 = vmatprep.subr.bf16.mxu0 0
        %228 = vmatpush1.bf16.msra.mxu0 0
        %229 = vmatprep.subr.bf16.mxu0 0
        %230 = vmatpush1.bf16.msra.mxu0 0
        %231 = vmatprep.subr.bf16.mxu0 0
        %232 = vmatpush1.bf16.msra.mxu0 0
        %233 = vmatprep.subr.bf16.mxu0 0
        %234 = vmatpush1.bf16.msra.mxu0 0
        %235 = vmatprep.subr.bf16.mxu0 0
        %236 = vmatpush1.bf16.msra.mxu0 0
        %237 = vmatprep.subr.bf16.mxu0 0
        %238 = vmatpush1.bf16.msra.mxu0 0
        %239 = vmatprep.subr.bf16.mxu0 0
        %240 = vmatpush1.bf16.msra.mxu0 0
        %241 = vmatprep.subr.bf16.mxu0 0
        %242 = vmatpush1.bf16.msra.mxu0 0
        %243 = vmatprep.subr.bf16.mxu0 0
        %244 = vmatpush1.bf16.msra.mxu0 0
        %245 = vmatprep.subr.bf16.mxu0 0
        %246 = vmatpush1.bf16.msra.mxu0 0
        %247 = vmatprep.subr.bf16.mxu0 0
        %248 = vmatpush1.bf16.msra.mxu0 0
        %249 = vmatprep.subr.bf16.mxu0 0
        %250 = vmatpush1.bf16.msra.mxu0 0
        %251 = vmatprep.mubr.bf16.mxu0 0
        %252 = vmatmul.mubr.bf16.gmra.mrb[0].mxu0 %v207
        %v253 = vpop.f32.mrb[0].mxu0
        %v254 = vadd.f32 0.0, %v253
        %v255 = vpop.f32.mrb[0].mxu0
        %v256 = vadd.f32 0.0, %v255
        %v257 = vpop.f32.mrb[0].mxu0
        %v258 = vpop.f32.mrb[0].mxu0
        %259 = vdwg.mxu0
        %260 = vmatprep.subr.bf16.mxu0 0
        %261 = vmatpush1.bf16.msra.mxu0 %v217
        %262 = vmatprep.subr.bf16.mxu0 0
        %263 = vmatpush1.bf16.msra.mxu0 0
        %264 = vmatprep.subr.bf16.mxu0 0
        %265 = vmatpush1.bf16.msra.mxu0 0
        %266 = vmatprep.subr.bf16.mxu0 0
        %267 = vmatpush1.bf16.msra.mxu0 0
        %268 = vmatprep.subr.bf16.mxu0 0
        %269 = vmatpush1.bf16.msra.mxu0 0
        %270 = vmatprep.subr.bf16.mxu0 0
        %271 = vmatpush1.bf16.msra.mxu0 0
        %272 = vmatprep.subr.bf16.mxu0 0
        %273 = vmatpush1.bf16.msra.mxu0 0
        %274 = vmatprep.subr.bf16.mxu0 0
        %275 = vmatpush1.bf16.msra.mxu0 0
        %276 = vmatprep.subr.bf16.mxu0 0
        %277 = vmatpush1.bf16.msra.mxu0 0
        %278 = vmatprep.subr.bf16.mxu0 0
        %279 = vmatpush1.bf16.msra.mxu0 0
        %280 = vmatprep.subr.bf16.mxu0 0
        %281 = vmatpush1.bf16.msra.mxu0 0
        %282 = vmatprep.subr.bf16.mxu0 0
        %283 = vmatpush1.bf16.msra.mxu0 0
        %284 = vmatprep.subr.bf16.mxu0 0
        %285 = vmatpush1.bf16.msra.mxu0 0
        %286 = vmatprep.subr.bf16.mxu0 0
        %287 = vmatpush1.bf16.msra.mxu0 0
        %288 = vmatprep.subr.bf16.mxu0 0
        %289 = vmatpush1.bf16.msra.mxu0 0
        %290 = vmatprep.subr.bf16.mxu0 0
        %291 = vmatpush1.bf16.msra.mxu0 0
        %292 = vmatprep.mubr.bf16.mxu0 0
        %293 = vmatmul.mubr.bf16.gmra.mrb[0].mxu0 %v207
        %v294 = vpop.f32.mrb[0].mxu0
        %v295 = vadd.f32 0.0, %v294
        %v296 = vpop.f32.mrb[0].mxu0
        %v297 = vpop.f32.mrb[0].mxu0
        %v298 = vpop.f32.mrb[0].mxu0
        %299 = vdwg.mxu0
        %v300 = vpack.c.bf16 %v254, %v254
        %v301 = vpack.c.bf16 %v256, %v256
        %v302 = vpack.c.bf16 %v295, %v295
        %v306 = vcombine.low %v300, %v301
        %v308 = vunpack.c.l.s4 1983009808
        %v309 = vunpack.c.0.s8 %v308
        %v310 = vlaneseq
        %v311 = vshrl.u32 %v310, 7
        %v312 = vsub.s32 %v309, %v311
        %v313 = vrot.slane %v306, %v312
        %v315 = vunpack.c.l.s4 1983009808
        %v316 = vunpack.c.0.s8 %v315
        %v317 = vlaneseq
        %v318 = vshrl.u32 %v317, 7
        %v319 = vsub.s32 %v316, %v318
        %v320 = vrot.slane %v302, %v319
        %v321 = vcombine.low %v313, %v320
        %323 = vst [vmem:[%s190] sm:$0x3f] %v321
        %s324 = sand.u32 %s91, 1
        %s325 = scalar_lea.sflag [#allocation4], %s324
        %s326 = sand.u32 %s91, 1
        %s327 = smul.addr %s326, 6
        %s328 = scalar_lea.vmem [#allocation7], %s327
        // Predicated region
        $region37: #{tpu_custom_call.1} parent=27 // pred_check
          %p329 = pneg %p101
        $region38: #{tpu_custom_call.1} parent=27 // pred_check_branch
          %331 = sbr.rel (%p329) target = $region40
        $region39: #{tpu_custom_call.1} parent=27 // pred_region
          %s332 = smul.u32 3, %s25
          %s334 = ssub.s32 96, 96
          %335 = vsyncadd %s325, %s334
          %s336 = smul.addr %s24, 3
          %s337 = sadd.s32 %s332, %s336
          %s338 = smul.addr %s337, 32
          %s339 = scalar_lea.hbm %s2, %s338
          %s341 = sshll.u32 %s328, 4
          %s342 = int_to_ptr.vmem [resolvable:$true] %s341
          %344 = dma.vmem_to_hbm [thread:$0]  %s342, 96, %s339, %s325
        $region40: #{tpu_custom_call.1} parent=27 // pred_fallthru
          _
      $region28: #{tpu_custom_call.1} parent=5 // pred_fallthru
        _
      %p345 = scmp.le.s32.totalorder 2, %s15
      // Predicated region
      $region41: #{tpu_custom_call.1} parent=5 // pred_check
        %p346 = pneg %p345
      $region42: #{tpu_custom_call.1} parent=5 // pred_check_branch
        %348 = sbr.rel (%p346) target = $region44
      $region43: #{tpu_custom_call.1} parent=5 // pred_region
        %s349 = ssub.s32 %s15, 2
        // Predicated region
        $region45: #{tpu_custom_call.1} parent=43 // pred_check
          %p350 = pneg %p107
        $region46: #{tpu_custom_call.1} parent=43 // pred_check_branch
          %352 = sbr.rel (%p350) target = $region48
        $region47: #{tpu_custom_call.1} parent=43 // pred_region
          %s353 = sand.u32 %s92, 1
          %s354 = scalar_lea.sflag [#allocation4], %s353
          %s355 = sand.u32 %s92, 1
          %s356 = smul.addr %s355, 6
          %s357 = scalar_lea.vmem [#allocation7], %s356
          %358 = dma.done %s354, 96
        $region48: #{tpu_custom_call.1} parent=43 // pred_fallthru
          _
      $region44: #{tpu_custom_call.1} parent=5 // pred_fallthru
        _
    $region6: #{tpu_custom_call.1} parent=1 // loop_footer
      %s19 = sadd.s32 1, %s15
    $region7: #{tpu_custom_call.1} parent=1 // loop_footer_branch
      %14 = sbr.rel target = $region3
    $region8: #{tpu_custom_call.1} parent=1 // loop_exit
      _
    %359 = vsyncpa [#allocation3], 1
    %s360 = scalar_lea.sflag [#allocation3], 1
    %361 = vsyncpa %s360, 1
    %362 = vsyncpa [#allocation6], 1
    %s363 = scalar_lea.sflag [#allocation6], 1
    %364 = vsyncpa %s363, 1
    %365 = vsyncpa [#allocation4], 1
    %s366 = scalar_lea.sflag [#allocation4], 1
    %367 = vsyncpa %s366, 1

</llo_original>
